<compile_context>
chip_gen: v7x
topology: tpu7x:2x2x1
jax: 0.10.0
libtpu: 0.0.40
codegen_flags: <defaults>
</compile_context>

<pallas_src>
import functools

import jax
import jax.numpy as jnp
from jax.experimental import pallas as pl
from jax.experimental.pallas import tpu as pltpu

LANE = 128
SUBLANE = 8


def _round_up(x, m):
    return ((x + m - 1) // m) * m


def cnn_fused_kernel(p_ref, w_ref, b_ref, hw_ref, hb_ref,
                     feat_ref, logit_ref, acc_ref, *, inv_hw):
    """One (batch, spatial-tile) step of fused conv(im2col) + ReLU + avg-pool (+ heads).

    p_ref:     (TS, Kpad)    bf16 im2col patches for this tile (lane-dense, zero-padded K)
    w_ref:     (Kpad, Cpad)  bf16 conv weight, im2col-flattened + zero-padded
    b_ref:     (1, Cpad)     f32 conv bias (zero-padded)
    hw_ref:    (Cpad, Npad)  f32 stacked head weights (zero-padded; real cols 0..2)
    hb_ref:    (1, Npad)     f32 stacked head biases (zero-padded)
    feat_ref:  (1, 1, Cpad)  f32 pooled features for this batch row (output)
    logit_ref: (1, 1, Npad)  f32 head logits for this batch row (output)
    acc_ref:   (1, Cpad)     f32 running pooled-sum scratch
    """
    s = pl.program_id(1)

    @pl.when(s == 0)
    def _():
        acc_ref[...] = jnp.zeros_like(acc_ref)

    # Conv as a single lane-dense MXU matmul: (TS, Kpad) x (Kpad, Cpad) -> f32.
    y = jnp.dot(p_ref[...], w_ref[...], preferred_element_type=jnp.float32)
    y = jnp.maximum(y + b_ref[...], 0.0)                      # bias + ReLU

    # Accumulate-as-you-go global average pool (running sum over spatial rows).
    acc_ref[...] += jnp.sum(y, axis=0, keepdims=True)

    @pl.when(s == pl.num_programs(1) - 1)
    def _():
        feat = acc_ref[...] * inv_hw                          # (1, Cpad), full-lane
        feat_ref[...] = feat[None]
        # Three Linear(C_feat, 1) heads as one lane-padded matmul -> unmasked store;
        # real logits live in lanes 0..2 and are sliced in the wrapper.
        logit_ref[...] = (jnp.dot(feat, hw_ref[...],
                                  preferred_element_type=jnp.float32)
                          + hb_ref[...])[None]


def cnn_model_forward(x_nchw, params, *, spatial_tile=128):
    """Mirrors CNN_model.forward: returns ([logits_0, logits_1, logits_2], features)."""
    conv_w, conv_b, head_w, head_b = params
    B, Cin, H, W = x_nchw.shape
    Cfeat = conv_w.shape[-1]
    HW = H * W

    K = 9 * Cin
    Kpad = _round_up(K, LANE)          # contraction dim padded toward MXU depth
    Cpad = _round_up(Cfeat, LANE)      # feature lanes padded -> full-lane stores
    Npad = LANE                        # 3 heads padded to a full lane dim

    TS = spatial_tile if HW % spatial_tile == 0 else HW
    assert HW % TS == 0 and TS % SUBLANE == 0, "spatial tile must divide H*W, mult of 8"
    n_s = HW // TS

    # ---- Glue (XLA, outside the kernel): lane-dense im2col re-layout ------------
    # NCHW -> NHWC, zero-pad for the 3x3/pad=1 conv, and gather the 9 taps onto the
    # channel (lane) axis so the kernel sees a dense (B*H*W, Kpad) bf16 patch matrix.
    # (This replaces the former in-kernel Cin=4 lane-sparse slicing, which was the
    #  dominant relayout cost; the conv zero-padding is folded into this same pass.)
    x = jnp.transpose(x_nchw, (0, 2, 3, 1)).astype(jnp.float32)
    x_pad = jnp.pad(x, ((0, 0), (1, 1), (1, 1), (0, 0)))
    taps = [x_pad[:, kh:kh + H, kw:kw + W, :] for kh in range(3) for kw in range(3)]
    patches = jnp.concatenate(taps, axis=-1).reshape(B * HW, K)
    patches = jnp.pad(patches, ((0, 0), (0, Kpad - K))).astype(jnp.bfloat16)

    # Conv weight (3,3,Cin,Cfeat) -> (9*Cin, Cfeat), zero-padded, bf16 for the MXU.
    w2d = jnp.pad(conv_w.reshape(K, Cfeat),
                  ((0, Kpad - K), (0, Cpad - Cfeat))).astype(jnp.bfloat16)
    b2d = jnp.pad(conv_b.reshape(1, Cfeat),
                  ((0, 0), (0, Cpad - Cfeat))).astype(jnp.float32)
    hw2d = jnp.pad(head_w, ((0, Cpad - Cfeat),
                            (0, Npad - head_w.shape[-1]))).astype(jnp.float32)
    hb2d = jnp.pad(head_b.reshape(1, -1),
                   ((0, 0), (0, Npad - head_b.shape[-1]))).astype(jnp.float32)

    kernel = functools.partial(cnn_fused_kernel, inv_hw=1.0 / HW)

    feat_p, logit_p = pl.pallas_call(
        kernel,
        out_shape=(
            jax.ShapeDtypeStruct((B, 1, Cpad), jnp.float32),
            jax.ShapeDtypeStruct((B, 1, Npad), jnp.float32),
        ),
        grid_spec=pltpu.PrefetchScalarGridSpec(
            num_scalar_prefetch=0,
            grid=(B, n_s),                      # (batch, spatial reduction)
            in_specs=[
                pl.BlockSpec((TS, Kpad), lambda b, s: (b * n_s + s, 0)),
                pl.BlockSpec((Kpad, Cpad), lambda b, s: (0, 0)),
                pl.BlockSpec((1, Cpad), lambda b, s: (0, 0)),
                pl.BlockSpec((Cpad, Npad), lambda b, s: (0, 0)),
                pl.BlockSpec((1, Npad), lambda b, s: (0, 0)),
            ],
            out_specs=(
                pl.BlockSpec((1, 1, Cpad), lambda b, s: (b, 0, 0)),
                pl.BlockSpec((1, 1, Npad), lambda b, s: (b, 0, 0)),
            ),
            scratch_shapes=[pltpu.VMEM((1, Cpad), jnp.float32)],
        ),
        compiler_params=pltpu.CompilerParams(
            dimension_semantics=("parallel", "arbitrary")),
    )(patches, w2d, b2d, hw2d, hb2d)

    feat = feat_p[:, 0, :Cfeat]
    logits = logit_p[:, 0, :3]
    return [logits[:, 0:1], logits[:, 1:2], logits[:, 2:3]], feat


def init_params(key, c_in, c_feat):
    """Deterministic synthetic parameter init (no checkpoint load)."""
    k1, k2, k3, k4 = jax.random.split(key, 4)
    conv_w = jax.random.normal(k1, (3, 3, c_in, c_feat), jnp.float32) * 0.1   # HWIO
    conv_b = jax.random.normal(k2, (1, c_feat), jnp.float32) * 0.1
    # head_w[:, i] corresponds to nn.Linear(c_feat, 1) weight of head_i (transposed).
    head_w = jax.random.normal(k3, (c_feat, 3), jnp.float32) * 0.1
    head_b = jax.random.normal(k4, (1, 3), jnp.float32) * 0.1
    return conv_w, conv_b, head_w, head_b


def reference_forward(x_nchw, params):
    """Pure-JAX reference (same bf16-input / f32-accumulate numerics as the kernel)."""
    conv_w, conv_b, head_w, head_b = params
    x = jnp.transpose(x_nchw, (0, 2, 3, 1)).astype(jnp.bfloat16)
    y = jax.lax.conv_general_dilated(
        x, conv_w.astype(jnp.bfloat16), window_strides=(1, 1), padding="SAME",
        dimension_numbers=("NHWC", "HWIO", "NHWC"),
        preferred_element_type=jnp.float32)
    y = jnp.maximum(y + conv_b.reshape(1, 1, 1, -1), 0.0)
    feat = y.mean(axis=(1, 2))
    logits = feat @ head_w + head_b.reshape(1, -1)
    return logits, feat


if __name__ == "__main__":
    B, C_in, H, W = 2, 4, 16, 16
    C_feat = 32  # num_ftrs (= base_model.fc.in_features)

    key = jax.random.PRNGKey(0)
    kx, kp = jax.random.split(key)
    x = jax.random.normal(kx, (B, C_in, H, W), jnp.float32)
    params = init_params(kp, C_in, C_feat)

    (l0, l1, l2), feat = jax.jit(cnn_model_forward)(x, params)
    jax.block_until_ready((l0, l1, l2, feat))

    # Sanity-check against the pure-JAX reference.
    ref_logits, ref_feat = reference_forward(x, params)
    assert l0.shape == (B, 1) and l1.shape == (B, 1) and l2.shape == (B, 1)
    assert feat.shape == (B, C_feat)
    assert jnp.allclose(feat, ref_feat, atol=1e-3, rtol=1e-3)
    assert jnp.allclose(jnp.concatenate([l0, l1, l2], axis=1), ref_logits,
                        atol=1e-3, rtol=1e-3)

    print("KERNEL_OK")
</pallas_src>

<mosaic_0001>
module attributes {stable_mosaic.version = 11 : i64} {
  func.func @cnn_fused_kernel(%arg0: i32, %arg1: i32, %arg2: memref<128x128xbf16, #tpu.memory_space<vmem>>, %arg3: memref<128x128xbf16, #tpu.memory_space<vmem>>, %arg4: memref<1x128xf32, #tpu.memory_space<vmem>>, %arg5: memref<128x128xf32, #tpu.memory_space<vmem>>, %arg6: memref<1x128xf32, #tpu.memory_space<vmem>>, %arg7: memref<1x1x128xf32, #tpu.memory_space<vmem>>, %arg8: memref<1x1x128xf32, #tpu.memory_space<vmem>>, %arg9: memref<1x128xf32, #tpu.memory_space<vmem>>) attributes {dimension_semantics = [#tpu.dimension_semantics<parallel>, #tpu.dimension_semantics<arbitrary>], iteration_bounds = array<i64: 2, 2>, scalar_prefetch = 0 : i64, scratch_operands = 1 : i64, tpu.core_type = #tpu.core_type<tc>, window_params = [{transform_indices = @transform_0, window_bounds = array<i64: 128, 128>}, {pipeline_mode = #tpu.pipeline_mode<synchronous>, transform_indices = @transform_1, window_bounds = array<i64: 128, 128>}, {pipeline_mode = #tpu.pipeline_mode<synchronous>, transform_indices = @transform_2, window_bounds = array<i64: 1, 128>}, {pipeline_mode = #tpu.pipeline_mode<synchronous>, transform_indices = @transform_3, window_bounds = array<i64: 128, 128>}, {pipeline_mode = #tpu.pipeline_mode<synchronous>, transform_indices = @transform_4, window_bounds = array<i64: 1, 128>}, {transform_indices = @transform_5, window_bounds = array<i64: 1, 1, 128>}, {transform_indices = @transform_6, window_bounds = array<i64: 1, 1, 128>}]} {
    %c0_i32 = arith.constant 0 : i32
    %0 = arith.cmpi eq, %arg1, %c0_i32 : i32
    %1 = arith.extui %0 : i1 to i32
    %c0_i32_0 = arith.constant 0 : i32
    %2 = arith.cmpi ne, %1, %c0_i32_0 : i32
    scf.if %2 {
      %cst_13 = arith.constant 0.000000e+00 : f32
      %19 = vector.broadcast %cst_13 : f32 to vector<1x128xf32>
      %c0_14 = arith.constant 0 : index
      %c0_15 = arith.constant 0 : index
      %20 = vector.load %arg9[%c0_14, %c0_15] : memref<1x128xf32, #tpu.memory_space<vmem>>, vector<1x128xf32>
      tpu.vector_store %arg9[%c0_14, %c0_15], %19 {strides = array<i32>} : memref<1x128xf32, #tpu.memory_space<vmem>>, vector<1x128xf32>,
    } else {
    }
    %c0 = arith.constant 0 : index
    %c0_1 = arith.constant 0 : index
    %3 = vector.load %arg2[%c0, %c0_1] : memref<128x128xbf16, #tpu.memory_space<vmem>>, vector<128x128xbf16>
    %c0_2 = arith.constant 0 : index
    %c0_3 = arith.constant 0 : index
    %4 = vector.load %arg3[%c0_2, %c0_3] : memref<128x128xbf16, #tpu.memory_space<vmem>>, vector<128x128xbf16>
    %cst = arith.constant dense<0.000000e+00> : vector<128x128xf32>
    %5 = tpu.matmul %3, %4, %cst {dimension_numbers = #tpu.dot_dimension_numbers<[1], [0], [0], [1], [0, 0, 1, 1], [], []>} : vector<128x128xbf16>, vector<128x128xbf16>, vector<128x128xf32> -> vector<128x128xf32>
    %c0_4 = arith.constant 0 : index
    %c0_5 = arith.constant 0 : index
    %6 = vector.load %arg4[%c0_4, %c0_5] : memref<1x128xf32, #tpu.memory_space<vmem>>, vector<1x128xf32>
    %7 = vector.broadcast %6 : vector<1x128xf32> to vector<128x128xf32>
    %8 = arith.addf %5, %7 : vector<128x128xf32>
    %cst_6 = arith.constant 0.000000e+00 : f32
    %9 = vector.broadcast %cst_6 : f32 to vector<128x128xf32>
    %10 = arith.maximumf %8, %9 : vector<128x128xf32>
    %c0_7 = arith.constant 0 : index
    %c0_8 = arith.constant 0 : index
    %11 = vector.load %arg9[%c0_7, %c0_8] : memref<1x128xf32, #tpu.memory_space<vmem>>, vector<1x128xf32>
    %cst_9 = arith.constant dense<0.000000e+00> : vector<128xf32>
    %12 = vector.multi_reduction <add>, %10, %cst_9 [0] : vector<128x128xf32> to vector<128xf32>
    %13 = vector.shape_cast %12 : vector<128xf32> to vector<1x128xf32>
    %14 = arith.addf %11, %13 : vector<1x128xf32>
    %c0_10 = arith.constant 0 : index
    %c0_11 = arith.constant 0 : index
    %15 = vector.load %arg9[%c0_10, %c0_11] : memref<1x128xf32, #tpu.memory_space<vmem>>, vector<1x128xf32>
    tpu.vector_store %arg9[%c0_10, %c0_11], %14 {strides = array<i32>} : memref<1x128xf32, #tpu.memory_space<vmem>>, vector<1x128xf32>,
    %c1_i32 = arith.constant 1 : i32
    %16 = arith.cmpi eq, %arg1, %c1_i32 : i32
    %17 = arith.extui %16 : i1 to i32
    %c0_i32_12 = arith.constant 0 : i32
    %18 = arith.cmpi ne, %17, %c0_i32_12 : i32
    scf.if %18 {
      %c0_13 = arith.constant 0 : index
      %c0_14 = arith.constant 0 : index
      %19 = vector.load %arg9[%c0_13, %c0_14] : memref<1x128xf32, #tpu.memory_space<vmem>>, vector<1x128xf32>
      %cst_15 = arith.constant 3.906250e-03 : f32
      %20 = vector.broadcast %cst_15 : f32 to vector<1x128xf32>
      %21 = arith.mulf %19, %20 : vector<1x128xf32>
      %22 = vector.shape_cast %21 : vector<1x128xf32> to vector<1x1x128xf32>
      %c0_16 = arith.constant 0 : index
      %c0_17 = arith.constant 0 : index
      %c0_18 = arith.constant 0 : index
      %23 = vector.load %arg7[%c0_16, %c0_17, %c0_18] : memref<1x1x128xf32, #tpu.memory_space<vmem>>, vector<1x1x128xf32>
      tpu.vector_store %arg7[%c0_16, %c0_17, %c0_18], %22 {strides = array<i32>} : memref<1x1x128xf32, #tpu.memory_space<vmem>>, vector<1x1x128xf32>,
      %c0_19 = arith.constant 0 : index
      %c0_20 = arith.constant 0 : index
      %24 = vector.load %arg5[%c0_19, %c0_20] : memref<128x128xf32, #tpu.memory_space<vmem>>, vector<128x128xf32>
      %cst_21 = arith.constant dense<0.000000e+00> : vector<1x128xf32>
      %25 = tpu.matmul %21, %24, %cst_21 {dimension_numbers = #tpu.dot_dimension_numbers<[1], [0], [0], [1], [0, 0, 1, 1], [], []>} : vector<1x128xf32>, vector<128x128xf32>, vector<1x128xf32> -> vector<1x128xf32>
      %c0_22 = arith.constant 0 : index
      %c0_23 = arith.constant 0 : index
      %26 = vector.load %arg6[%c0_22, %c0_23] : memref<1x128xf32, #tpu.memory_space<vmem>>, vector<1x128xf32>
      %27 = arith.addf %25, %26 : vector<1x128xf32>
      %28 = vector.shape_cast %27 : vector<1x128xf32> to vector<1x1x128xf32>
      %c0_24 = arith.constant 0 : index
      %c0_25 = arith.constant 0 : index
      %c0_26 = arith.constant 0 : index
      %29 = vector.load %arg8[%c0_24, %c0_25, %c0_26] : memref<1x1x128xf32, #tpu.memory_space<vmem>>, vector<1x1x128xf32>
      tpu.vector_store %arg8[%c0_24, %c0_25, %c0_26], %28 {strides = array<i32>} : memref<1x1x128xf32, #tpu.memory_space<vmem>>, vector<1x1x128xf32>,
    } else {
    }
    return
  }
  func.func @transform_0(%arg0: i32, %arg1: i32) -> (i32, i32) {
    %c2_i32 = arith.constant 2 : i32
    %0 = arith.muli %arg0, %c2_i32 : i32
    %1 = arith.addi %0, %arg1 : i32
    %c0_i32 = arith.constant 0 : i32
    %c0_i32_0 = arith.constant 0 : i32
    return %1, %c0_i32 : i32, i32
  }
  func.func @transform_1(%arg0: i32, %arg1: i32) -> (i32, i32) {
    %c0_i32 = arith.constant 0 : i32
    %c0_i32_0 = arith.constant 0 : i32
    %c0_i32_1 = arith.constant 0 : i32
    return %c0_i32, %c0_i32_0 : i32, i32
  }
  func.func @transform_2(%arg0: i32, %arg1: i32) -> (i32, i32) {
    %c0_i32 = arith.constant 0 : i32
    %c0_i32_0 = arith.constant 0 : i32
    %c0_i32_1 = arith.constant 0 : i32
    return %c0_i32, %c0_i32_0 : i32, i32
  }
  func.func @transform_3(%arg0: i32, %arg1: i32) -> (i32, i32) {
    %c0_i32 = arith.constant 0 : i32
    %c0_i32_0 = arith.constant 0 : i32
    %c0_i32_1 = arith.constant 0 : i32
    return %c0_i32, %c0_i32_0 : i32, i32
  }
  func.func @transform_4(%arg0: i32, %arg1: i32) -> (i32, i32) {
    %c0_i32 = arith.constant 0 : i32
    %c0_i32_0 = arith.constant 0 : i32
    %c0_i32_1 = arith.constant 0 : i32
    return %c0_i32, %c0_i32_0 : i32, i32
  }
  func.func @transform_5(%arg0: i32, %arg1: i32) -> (i32, i32, i32) {
    %c0_i32 = arith.constant 0 : i32
    %c0_i32_0 = arith.constant 0 : i32
    %c0_i32_1 = arith.constant 0 : i32
    return %arg0, %c0_i32, %c0_i32_0 : i32, i32, i32
  }
  func.func @transform_6(%arg0: i32, %arg1: i32) -> (i32, i32, i32) {
    %c0_i32 = arith.constant 0 : i32
    %c0_i32_0 = arith.constant 0 : i32
    %c0_i32_1 = arith.constant 0 : i32
    return %arg0, %c0_i32, %c0_i32_0 : i32, i32, i32
  }
}

</mosaic_0001>

<llo_original>
// kernel: cnn_model_forward.1
$region0: #{cnn_model_forward.1}
  #allocation0 [shape = 'u32[]', space=smem, size = 0x4, offset = 0x4, fixed_abs, tag = 'smem constant byte address 0x4 - core index']
  #allocation1 [shape = 'u32[144,128]{1,0:T(1,128)}', space=vmem, size = 0x12000, scoped, tag = 'internal scratch']
  #allocation2 [shape = 'f32[1,128]{1,0:T(1,128)}', space=vmem, size = 0x200, scoped, tag = 'scratch operand']
  %s0 = inlined_call_operand.vmem [shape: bf16[512,128], index: 0, kind: input, shape index: {}]
  %s1 = inlined_call_operand.vmem [shape: bf16[128,128], index: 1, kind: input, shape index: {}]
  %s2 = inlined_call_operand.vmem [shape: f32[1,128], index: 2, kind: input, shape index: {}]
  %s3 = inlined_call_operand.vmem [shape: f32[128,128], index: 3, kind: input, shape index: {}]
  %s4 = inlined_call_operand.vmem [shape: f32[1,128], index: 4, kind: input, shape index: {}]
  %s5 = inlined_call_operand.hbm [shape: f32[2,1,128], index: 5, kind: output, shape index: {0}]
  %s6 = inlined_call_operand.vmem [shape: f32[2,1,128], index: 6, kind: output, shape index: {1}]
  %7 = xla_tuple %s5, %s6
  %s8 = sld [smem:[#allocation0]]
  $region69: #{cnn_model_forward.1} parent=0
    _
  %s10 = ssub.s32 1, %s8
  %s11 = scalar_select 0, %s10, %s8
  $region1: #{cnn_model_forward.1} parent=0
    #allocation3 [shape = 'u8[1024]{0}', space=vmem, size = 0x400, scoped, tag = 'output window, operand 0']
    #allocation4 [shape = 's32[2]{0}', space=sflag, size = 0x8, scoped, tag = 'scoped memory for cnn_model_forward.1']
    %12 = vsyncpa [#allocation4], 0
    %s13 = scalar_lea.sflag [#allocation4], 1
    %14 = vsyncpa %s13, 0
    loop: start=0, step=1, limit=6
    $region2: #{cnn_model_forward.1} parent=1 // loop_pre_header
      _
    $region3: #{cnn_model_forward.1} parent=1 // loop_header
      %s16 = sphi 0, %s20
      %p17 = scmp.ge.s32.totalorder %s16, 6
      %s23 = sphi 0, %s35
      %s24 = sphi 0, %s31
      %s25 = sphi 0, %s23
      %s26 = sphi 0, %s24
      %s27 = sphi 0, %s25
      %s28 = sphi 0, %s26
      %s42 = sphi 0, %s44
      %s45 = sphi 0, %s42
      %s46 = sphi 0, %s45
      %s62 = sphi 0, %s46
      %s66 = sphi 0, %s66
      %s68 = sphi 0, %s66
      %s69 = sphi 0, %s68
      %s83 = sphi 0, %s69
      %s87 = sphi 0, %s87
      %s89 = sphi 0, %s87
      %s90 = sphi 0, %s89
      %s104 = sphi 0, %s90
      %s108 = sphi 0, %s108
      %s110 = sphi 0, %s108
      %s111 = sphi 0, %s110
      %s125 = sphi 0, %s111
      %s129 = sphi 0, %s129
      %s131 = sphi 0, %s129
      %s132 = sphi 0, %s131
      %s146 = sphi 0, %s132
      %s152 = sphi 0, %s154
      %s155 = sphi 0, %s152
      %s156 = sphi 0, %s155
      %s172 = sphi 0, %s156
      %s178 = sphi 0, %s180
      %s181 = sphi 0, %s178
      %s182 = sphi 0, %s181
      %s198 = sphi 0, %s182
    $region4: #{cnn_model_forward.1} parent=1 // loop_header_branch
      %19 = sbr.rel (%p17) target = $region8
    $region5: #{cnn_model_forward.1} parent=1 // loop_body
      %s21 = ssub.s32 %s16, 1
      %s22 = ssub.s32 %s16, 2
      %s29 = sadd.s32 1, %s24
      %p30 = scmp.ge.s32.totalorder %s29, 2
      %s31 = scalar_select %p30, 0, %s29
      %s32 = sadd.s32 1, %s23
      %s33 = scalar_select %p30, %s32, %s23
      %p34 = scmp.ge.s32.totalorder %s33, 2
      %s35 = scalar_select %p34, 0, %s33
      %s36 = smul.u32 %s23, 2
      %s37 = sadd.s32 %s36, %s24
      %s38 = smul.u32 %s35, 2
      %s39 = sadd.s32 %s38, %s31
      %s40 = ssub.s32 %s37, %s39
      %p41 = scmp.eq.s32.totalorder %s40, 0
      %s43 = sadd.s32 %s42, 1
      %s44 = scalar_select %p41, %s42, %s43
      %p47 = pneg %p41
      %p48 = scmp.eq.s32.totalorder %s16, 3
      %p49 = por %p47, %p48
      %p50 = scmp.ne.s32.totalorder %s42, %s45
      %p51 = scmp.eq.s32.totalorder %s16, 0
      %p52 = por %p50, %p51
      %p53 = scmp.ne.s32.totalorder %s42, %s45
      %p54 = scmp.eq.s32.totalorder %s21, 3
      %p55 = por %p53, %p54
      %p56 = scmp.ne.s32.totalorder %s45, %s46
      %p57 = scmp.eq.s32.totalorder %s21, 0
      %p58 = por %p56, %p57
      %p59 = scmp.ne.s32.totalorder %s45, %s46
      %p60 = scmp.eq.s32.totalorder %s22, 3
      %p61 = por %p59, %p60
      %p63 = scmp.ne.s32.totalorder %s46, %s62
      %p64 = scmp.eq.s32.totalorder %s22, 0
      %p65 = por %p63, %p64
      %s67 = sadd.s32 %s66, 1
      %p70 = scmp.eq.s32.totalorder %s16, 3
      %p71 = scmp.ne.s32.totalorder %s66, %s68
      %p72 = scmp.eq.s32.totalorder %s16, 0
      %p73 = por %p71, %p72
      %p74 = scmp.ne.s32.totalorder %s66, %s68
      %p75 = scmp.eq.s32.totalorder %s21, 3
      %p76 = por %p74, %p75
      %p77 = scmp.ne.s32.totalorder %s68, %s69
      %p78 = scmp.eq.s32.totalorder %s21, 0
      %p79 = por %p77, %p78
      %p80 = scmp.ne.s32.totalorder %s68, %s69
      %p81 = scmp.eq.s32.totalorder %s22, 3
      %p82 = por %p80, %p81
      %p84 = scmp.ne.s32.totalorder %s69, %s83
      %p85 = scmp.eq.s32.totalorder %s22, 0
      %p86 = por %p84, %p85
      %s88 = sadd.s32 %s87, 1
      %p91 = scmp.eq.s32.totalorder %s16, 3
      %p92 = scmp.ne.s32.totalorder %s87, %s89
      %p93 = scmp.eq.s32.totalorder %s16, 0
      %p94 = por %p92, %p93
      %p95 = scmp.ne.s32.totalorder %s87, %s89
      %p96 = scmp.eq.s32.totalorder %s21, 3
      %p97 = por %p95, %p96
      %p98 = scmp.ne.s32.totalorder %s89, %s90
      %p99 = scmp.eq.s32.totalorder %s21, 0
      %p100 = por %p98, %p99
      %p101 = scmp.ne.s32.totalorder %s89, %s90
      %p102 = scmp.eq.s32.totalorder %s22, 3
      %p103 = por %p101, %p102
      %p105 = scmp.ne.s32.totalorder %s90, %s104
      %p106 = scmp.eq.s32.totalorder %s22, 0
      %p107 = por %p105, %p106
      %s109 = sadd.s32 %s108, 1
      %p112 = scmp.eq.s32.totalorder %s16, 3
      %p113 = scmp.ne.s32.totalorder %s108, %s110
      %p114 = scmp.eq.s32.totalorder %s16, 0
      %p115 = por %p113, %p114
      %p116 = scmp.ne.s32.totalorder %s108, %s110
      %p117 = scmp.eq.s32.totalorder %s21, 3
      %p118 = por %p116, %p117
      %p119 = scmp.ne.s32.totalorder %s110, %s111
      %p120 = scmp.eq.s32.totalorder %s21, 0
      %p121 = por %p119, %p120
      %p122 = scmp.ne.s32.totalorder %s110, %s111
      %p123 = scmp.eq.s32.totalorder %s22, 3
      %p124 = por %p122, %p123
      %p126 = scmp.ne.s32.totalorder %s111, %s125
      %p127 = scmp.eq.s32.totalorder %s22, 0
      %p128 = por %p126, %p127
      %s130 = sadd.s32 %s129, 1
      %p133 = scmp.eq.s32.totalorder %s16, 3
      %p134 = scmp.ne.s32.totalorder %s129, %s131
      %p135 = scmp.eq.s32.totalorder %s16, 0
      %p136 = por %p134, %p135
      %p137 = scmp.ne.s32.totalorder %s129, %s131
      %p138 = scmp.eq.s32.totalorder %s21, 3
      %p139 = por %p137, %p138
      %p140 = scmp.ne.s32.totalorder %s131, %s132
      %p141 = scmp.eq.s32.totalorder %s21, 0
      %p142 = por %p140, %p141
      %p143 = scmp.ne.s32.totalorder %s131, %s132
      %p144 = scmp.eq.s32.totalorder %s22, 3
      %p145 = por %p143, %p144
      %p147 = scmp.ne.s32.totalorder %s132, %s146
      %p148 = scmp.eq.s32.totalorder %s22, 0
      %p149 = por %p147, %p148
      %s150 = ssub.s32 %s23, %s35
      %p151 = scmp.eq.s32.totalorder %s150, 0
      %s153 = sadd.s32 %s152, 1
      %s154 = scalar_select %p151, %s152, %s153
      %p157 = pneg %p151
      %p158 = scmp.eq.s32.totalorder %s16, 3
      %p159 = por %p157, %p158
      %p160 = scmp.ne.s32.totalorder %s152, %s155
      %p161 = scmp.eq.s32.totalorder %s16, 0
      %p162 = por %p160, %p161
      %p163 = scmp.ne.s32.totalorder %s152, %s155
      %p164 = scmp.eq.s32.totalorder %s21, 3
      %p165 = por %p163, %p164
      %p166 = scmp.ne.s32.totalorder %s155, %s156
      %p167 = scmp.eq.s32.totalorder %s21, 0
      %p168 = por %p166, %p167
      %p169 = scmp.ne.s32.totalorder %s155, %s156
      %p170 = scmp.eq.s32.totalorder %s22, 3
      %p171 = por %p169, %p170
      %p173 = scmp.ne.s32.totalorder %s156, %s172
      %p174 = scmp.eq.s32.totalorder %s22, 0
      %p175 = por %p173, %p174
      %s176 = ssub.s32 %s23, %s35
      %p177 = scmp.eq.s32.totalorder %s176, 0
      %s179 = sadd.s32 %s178, 1
      %s180 = scalar_select %p177, %s178, %s179
      %p183 = pneg %p177
      %p184 = scmp.eq.s32.totalorder %s16, 3
      %p185 = por %p183, %p184
      %p186 = scmp.ne.s32.totalorder %s178, %s181
      %p187 = scmp.eq.s32.totalorder %s16, 0
      %p188 = por %p186, %p187
      %p189 = scmp.ne.s32.totalorder %s178, %s181
      %p190 = scmp.eq.s32.totalorder %s21, 3
      %p191 = por %p189, %p190
      %p192 = scmp.ne.s32.totalorder %s181, %s182
      %p193 = scmp.eq.s32.totalorder %s21, 0
      %p194 = por %p192, %p193
      %p195 = scmp.ne.s32.totalorder %s181, %s182
      %p196 = scmp.eq.s32.totalorder %s22, 3
      %p197 = por %p195, %p196
      %p199 = scmp.ne.s32.totalorder %s182, %s198
      %p200 = scmp.eq.s32.totalorder %s22, 0
      %p201 = por %p199, %p200
      %p202 = scmp.le.s32.totalorder 1, %s16
      %p203 = scmp.lt.s32.totalorder %s16, 5
      %p204 = pnand %p202, %p203
      %p205 = pneg %p204
      // Predicated region
      $region9: #{cnn_model_forward.1} parent=5 // pred_check
        _
      $region10: #{cnn_model_forward.1} parent=5 // pred_check_branch
        %207 = sbr.rel (%p204) target = $region12
      $region11: #{cnn_model_forward.1} parent=5 // pred_region
        %s208 = ssub.s32 %s16, 1
        // Predicated region
        $region13: #{cnn_model_forward.1} parent=11 // pred_check
          %p209 = pneg %p79
        $region14: #{cnn_model_forward.1} parent=11 // pred_check_branch
          %211 = sbr.rel (%p209) target = $region16
        $region15: #{cnn_model_forward.1} parent=11 // pred_region
          _
        $region16: #{cnn_model_forward.1} parent=11 // pred_fallthru
          _
        // Predicated region
        $region17: #{cnn_model_forward.1} parent=11 // pred_check
          %p212 = pneg %p100
        $region18: #{cnn_model_forward.1} parent=11 // pred_check_branch
          %214 = sbr.rel (%p212) target = $region20
        $region19: #{cnn_model_forward.1} parent=11 // pred_region
          _
        $region20: #{cnn_model_forward.1} parent=11 // pred_fallthru
          _
        // Predicated region
        $region21: #{cnn_model_forward.1} parent=11 // pred_check
          %p215 = pneg %p121
        $region22: #{cnn_model_forward.1} parent=11 // pred_check_branch
          %217 = sbr.rel (%p215) target = $region24
        $region23: #{cnn_model_forward.1} parent=11 // pred_region
          _
        $region24: #{cnn_model_forward.1} parent=11 // pred_fallthru
          _
        // Predicated region
        $region25: #{cnn_model_forward.1} parent=11 // pred_check
          %p218 = pneg %p142
        $region26: #{cnn_model_forward.1} parent=11 // pred_check_branch
          %220 = sbr.rel (%p218) target = $region28
        $region27: #{cnn_model_forward.1} parent=11 // pred_region
          _
        $region28: #{cnn_model_forward.1} parent=11 // pred_fallthru
          _
      $region12: #{cnn_model_forward.1} parent=5 // pred_fallthru
        _
      %p221 = scmp.lt.s32.totalorder %s16, 4
      // Predicated region
      $region29: #{cnn_model_forward.1} parent=5 // pred_check
        %p222 = pneg %p221
      $region30: #{cnn_model_forward.1} parent=5 // pred_check_branch
        %224 = sbr.rel (%p222) target = $region32
      $region31: #{cnn_model_forward.1} parent=5 // pred_region
        // Predicated region
        $region33: #{cnn_model_forward.1} parent=31 // pred_check
          %p225 = pneg %p52
        $region34: #{cnn_model_forward.1} parent=31 // pred_check_branch
          %227 = sbr.rel (%p225) target = $region36
        $region35: #{cnn_model_forward.1} parent=31 // pred_region
          %s228 = smul.u32 %s23, 2
          %s229 = sadd.s32 %s228, %s24
          %s230 = smul.u32 16, %s229
          %p231 = scmp.lt.s32.totalorder %s230, 63
          %s232 = scalar_select %p231, %s230, 63
          %s233 = smul.addr %s232, 4
          %s234 = scalar_lea.vmem %s0, %s233
          %s235 = smul.u32 %s23, 2
          %s236 = sadd.s32 %s235, %s24
          %s237 = smul.u32 16, %s236
        $region36: #{cnn_model_forward.1} parent=31 // pred_fallthru
          _
      $region32: #{cnn_model_forward.1} parent=5 // pred_fallthru
        _
      %p238 = scmp.le.s32.totalorder 1, %s16
      %p239 = scmp.lt.s32.totalorder %s16, 5
      %p240 = pnand %p238, %p239
      %p241 = pneg %p240
      // Predicated region
      $region37: #{cnn_model_forward.1} parent=5 // pred_check
        _
      $region38: #{cnn_model_forward.1} parent=5 // pred_check_branch
        %243 = sbr.rel (%p240) target = $region40
      $region39: #{cnn_model_forward.1} parent=5 // pred_region
        %s244 = ssub.s32 %s16, 1
        %s245 = smul.u32 %s25, 2
        %s246 = sadd.s32 %s245, %s26
        %s247 = smul.u32 16, %s246
        %p248 = scmp.lt.s32.totalorder %s247, 63
        %s249 = scalar_select %p248, %s247, 63
        %s250 = smul.addr %s249, 4
        %s251 = scalar_lea.vmem %s0, %s250
        %p252 = pneg %p58
        %p253 = pneg %p55
        %p254 = pneg %p79
        %p255 = pneg %p76
        %p256 = pneg %p100
        %p257 = pneg %p97
        %p258 = pneg %p121
        %p259 = pneg %p118
        %p260 = pneg %p142
        %p261 = pneg %p139
        %p262 = pneg %p168
        %p263 = pneg %p165
        %s264 = sand.u32 %s155, 1
        %s265 = scalar_lea.sflag [#allocation4], %s264
        %s266 = sand.u32 %s155, 1
        %s267 = scalar_lea.vmem [#allocation3], %s266
        %p268 = pneg %p194
        %p269 = pneg %p191
        %p270 = scmp.lt.s32.totalorder %s25, 1
        %s271 = scalar_select %p270, %s25, 1
        %s272 = scalar_lea.vmem %s6, %s271
        %s273 = smul.u32 %s25, 2
        %s274 = sadd.s32 %s273, %s26
        %s275 = smul.u32 16, %s274
        %p276 = scmp.lt.s32.totalorder %s275, 63
        %s277 = scalar_select %p276, %s275, 63
        %s278 = smul.addr %s277, 4
        %s279 = scalar_lea.vmem %s0, %s278
        %s280 = smul.u32 %s25, 2
        %s281 = sadd.s32 %s280, %s26
        %s282 = smul.u32 16, %s281
        %p283 = scmp.lt.s32.totalorder %s25, 1
        %s284 = scalar_select %p283, %s25, 1
        %s285 = scalar_lea.vmem %s6, %s284
        %p287 = scmp.eq.s32.totalorder %s26, 0
        // Predicated region
        $region41: #{cnn_model_forward.1} parent=39 // pred_check
          %p288 = pneg %p287
        $region42: #{cnn_model_forward.1} parent=39 // pred_check_branch
          %290 = sbr.rel (%p288) target = $region44
        $region43: #{cnn_model_forward.1} parent=39 // pred_region
          %291 = vst [vmem:[#allocation2] sm:$0x1] 0.0
        $region44: #{cnn_model_forward.1} parent=39 // pred_fallthru
          _
        %v292 = vld [vmem:[%s279] sm:$0xf]
        %v293 = vld [vmem:[%s279 + $0x4] sm:$0xf]
        %v294 = vld [vmem:[%s279 + $0x8] sm:$0xf]
        %v295 = vld [vmem:[%s279 + $0xc] sm:$0xf]
        %v296 = vld [vmem:[%s279 + $0x10] sm:$0xf]
        %v297 = vld [vmem:[%s279 + $0x14] sm:$0xf]
        %v298 = vld [vmem:[%s279 + $0x18] sm:$0xf]
        %v299 = vld [vmem:[%s279 + $0x1c] sm:$0xf]
        %v300 = vld [vmem:[%s279 + $0x20] sm:$0xf]
        %v301 = vld [vmem:[%s279 + $0x24] sm:$0xf]
        %v302 = vld [vmem:[%s279 + $0x28] sm:$0xf]
        %v303 = vld [vmem:[%s279 + $0x2c] sm:$0xf]
        %v304 = vld [vmem:[%s279 + $0x30] sm:$0xf]
        %v305 = vld [vmem:[%s279 + $0x34] sm:$0xf]
        %v306 = vld [vmem:[%s279 + $0x38] sm:$0xf]
        %v307 = vld [vmem:[%s279 + $0x3c] sm:$0xf]
        %v308 = vld [vmem:[%s1] sm:$0xf]
        %v309 = vld [vmem:[%s1 + $0x4] sm:$0xf]
        %v310 = vld [vmem:[%s1 + $0x8] sm:$0xf]
        %v311 = vld [vmem:[%s1 + $0xc] sm:$0xf]
        %v312 = vld [vmem:[%s1 + $0x10] sm:$0xf]
        %v313 = vld [vmem:[%s1 + $0x14] sm:$0xf]
        %v314 = vld [vmem:[%s1 + $0x18] sm:$0xf]
        %v315 = vld [vmem:[%s1 + $0x1c] sm:$0xf]
        %v316 = vld [vmem:[%s1 + $0x20] sm:$0xf]
        %v317 = vld [vmem:[%s1 + $0x24] sm:$0xf]
        %v318 = vld [vmem:[%s1 + $0x28] sm:$0xf]
        %v319 = vld [vmem:[%s1 + $0x2c] sm:$0xf]
        %v320 = vld [vmem:[%s1 + $0x30] sm:$0xf]
        %v321 = vld [vmem:[%s1 + $0x34] sm:$0xf]
        %v322 = vld [vmem:[%s1 + $0x38] sm:$0xf]
        %v323 = vld [vmem:[%s1 + $0x3c] sm:$0xf]
        %v324 = vld [vmem:[%s2] sm:$0x1]
        %v326 = vlaneseq
        %v327 = vshrl.u32 %v326, 7
        %v328 = vsub.s32 0, %v327
        %v329 = vrot.slane %v324, %v328
        %v347 = vunpack.c.l.b16 %v292
        %v348 = vunpack.c.l.b16 %v293
        %v349 = vunpack.c.l.b16 %v294
        %v350 = vunpack.c.l.b16 %v295
        %v351 = vunpack.c.l.b16 %v296
        %v352 = vunpack.c.l.b16 %v297
        %v353 = vunpack.c.l.b16 %v298
        %v354 = vunpack.c.l.b16 %v299
        %v355 = vunpack.c.l.b16 %v300
        %v356 = vunpack.c.l.b16 %v301
        %v357 = vunpack.c.l.b16 %v302
        %v358 = vunpack.c.l.b16 %v303
        %v359 = vunpack.c.l.b16 %v304
        %v360 = vunpack.c.l.b16 %v305
        %v361 = vunpack.c.l.b16 %v306
        %v362 = vunpack.c.l.b16 %v307
        %v363 = vpack.c.b16 %v348, %v347
        %v364 = vpack.c.b16 %v350, %v349
        %v365 = vpack.c.b16 %v352, %v351
        %v366 = vpack.c.b16 %v354, %v353
        %v367 = vpack.c.b16 %v356, %v355
        %v368 = vpack.c.b16 %v358, %v357
        %v369 = vpack.c.b16 %v360, %v359
        %v370 = vpack.c.b16 %v362, %v361
        %v395 = vunpack.c.l.b16 %v308
        %v396 = vunpack.c.l.b16 %v309
        %v397 = vunpack.c.l.b16 %v310
        %v398 = vunpack.c.l.b16 %v311
        %v399 = vunpack.c.l.b16 %v312
        %v400 = vunpack.c.l.b16 %v313
        %v401 = vunpack.c.l.b16 %v314
        %v402 = vunpack.c.l.b16 %v315
        %v403 = vunpack.c.l.b16 %v316
        %v404 = vunpack.c.l.b16 %v317
        %v405 = vunpack.c.l.b16 %v318
        %v406 = vunpack.c.l.b16 %v319
        %v407 = vunpack.c.l.b16 %v320
        %v408 = vunpack.c.l.b16 %v321
        %v409 = vunpack.c.l.b16 %v322
        %v410 = vunpack.c.l.b16 %v323
        %v411 = vpack.c.b16 %v396, %v395
        %v412 = vpack.c.b16 %v398, %v397
        %v413 = vpack.c.b16 %v400, %v399
        %v414 = vpack.c.b16 %v402, %v401
        %v415 = vpack.c.b16 %v404, %v403
        %v416 = vpack.c.b16 %v406, %v405
        %v417 = vpack.c.b16 %v408, %v407
        %v418 = vpack.c.b16 %v410, %v409
        %427 = vmatprep.subr.bf16.mxu0 0
        %428 = vmatpush1.bf16.msra.mxu0 %v411
        %429 = vmatprep.subr.bf16.mxu0 0
        %430 = vmatpush1.bf16.msra.mxu0 %v412
        %431 = vmatprep.subr.bf16.mxu0 0
        %432 = vmatpush1.bf16.msra.mxu0 %v413
        %433 = vmatprep.subr.bf16.mxu0 0
        %434 = vmatpush1.bf16.msra.mxu0 %v414
        %435 = vmatprep.subr.bf16.mxu0 0
        %436 = vmatpush1.bf16.msra.mxu0 %v415
        %437 = vmatprep.subr.bf16.mxu0 0
        %438 = vmatpush1.bf16.msra.mxu0 %v416
        %439 = vmatprep.subr.bf16.mxu0 0
        %440 = vmatpush1.bf16.msra.mxu0 %v417
        %441 = vmatprep.subr.bf16.mxu0 0
        %442 = vmatpush1.bf16.msra.mxu0 %v418
        %443 = vmatprep.subr.bf16.mxu0 0
        %444 = vmatpush1.bf16.msra.mxu0 0
        %445 = vmatprep.subr.bf16.mxu0 0
        %446 = vmatpush1.bf16.msra.mxu0 0
        %447 = vmatprep.subr.bf16.mxu0 0
        %448 = vmatpush1.bf16.msra.mxu0 0
        %449 = vmatprep.subr.bf16.mxu0 0
        %450 = vmatpush1.bf16.msra.mxu0 0
        %451 = vmatprep.subr.bf16.mxu0 0
        %452 = vmatpush1.bf16.msra.mxu0 0
        %453 = vmatprep.subr.bf16.mxu0 0
        %454 = vmatpush1.bf16.msra.mxu0 0
        %455 = vmatprep.subr.bf16.mxu0 0
        %456 = vmatpush1.bf16.msra.mxu0 0
        %457 = vmatprep.subr.bf16.mxu0 0
        %458 = vmatpush1.bf16.msra.mxu0 0
        %459 = vmatprep.mubr.bf16.mxu0 0
        %460 = vmatmul.mubr.bf16.gmra.mrb[0].mxu0 %v363
        %v461 = vpop.f32.mrb[0].mxu0
        %v462 = vadd.f32 %v329, %v461
        %v463 = vpop.f32.mrb[0].mxu0
        %v464 = vpop.f32.mrb[0].mxu0
        %v465 = vadd.f32 %v329, %v464
        %v466 = vpop.f32.mrb[0].mxu0
        %467 = vmatprep.mubr.bf16.mxu0 0
        %468 = vmatmul.mubr.bf16.gmra.mrb[0].mxu0 %v364
        %v469 = vpop.f32.mrb[0].mxu0
        %v470 = vadd.f32 %v329, %v469
        %v471 = vpop.f32.mrb[0].mxu0
        %v472 = vpop.f32.mrb[0].mxu0
        %v473 = vadd.f32 %v329, %v472
        %v474 = vpop.f32.mrb[0].mxu0
        %475 = vmatprep.mubr.bf16.mxu0 0
        %476 = vmatmul.mubr.bf16.gmra.mrb[0].mxu0 %v365
        %v477 = vpop.f32.mrb[0].mxu0
        %v478 = vadd.f32 %v329, %v477
        %v479 = vpop.f32.mrb[0].mxu0
        %v480 = vpop.f32.mrb[0].mxu0
        %v481 = vadd.f32 %v329, %v480
        %v482 = vpop.f32.mrb[0].mxu0
        %483 = vmatprep.mubr.bf16.mxu0 0
        %484 = vmatmul.mubr.bf16.gmra.mrb[0].mxu0 %v366
        %v485 = vpop.f32.mrb[0].mxu0
        %v486 = vadd.f32 %v329, %v485
        %v487 = vpop.f32.mrb[0].mxu0
        %v488 = vpop.f32.mrb[0].mxu0
        %v489 = vadd.f32 %v329, %v488
        %v490 = vpop.f32.mrb[0].mxu0
        %491 = vmatprep.mubr.bf16.mxu0 0
        %492 = vmatmul.mubr.bf16.gmra.mrb[0].mxu0 %v367
        %v493 = vpop.f32.mrb[0].mxu0
        %v494 = vadd.f32 %v329, %v493
        %v495 = vpop.f32.mrb[0].mxu0
        %v496 = vpop.f32.mrb[0].mxu0
        %v497 = vadd.f32 %v329, %v496
        %v498 = vpop.f32.mrb[0].mxu0
        %499 = vmatprep.mubr.bf16.mxu0 0
        %500 = vmatmul.mubr.bf16.gmra.mrb[0].mxu0 %v368
        %v501 = vpop.f32.mrb[0].mxu0
        %v502 = vadd.f32 %v329, %v501
        %v503 = vpop.f32.mrb[0].mxu0
        %v504 = vpop.f32.mrb[0].mxu0
        %v505 = vadd.f32 %v329, %v504
        %v506 = vpop.f32.mrb[0].mxu0
        %507 = vmatprep.mubr.bf16.mxu0 0
        %508 = vmatmul.mubr.bf16.gmra.mrb[0].mxu0 %v369
        %v509 = vpop.f32.mrb[0].mxu0
        %v510 = vadd.f32 %v329, %v509
        %v511 = vpop.f32.mrb[0].mxu0
        %v512 = vpop.f32.mrb[0].mxu0
        %v513 = vadd.f32 %v329, %v512
        %v514 = vpop.f32.mrb[0].mxu0
        %515 = vmatprep.mubr.bf16.mxu0 0
        %516 = vmatmul.mubr.bf16.gmra.mrb[0].mxu0 %v370
        %v517 = vpop.f32.mrb[0].mxu0
        %v518 = vadd.f32 %v329, %v517
        %v519 = vpop.f32.mrb[0].mxu0
        %v520 = vpop.f32.mrb[0].mxu0
        %v521 = vadd.f32 %v329, %v520
        %v522 = vpop.f32.mrb[0].mxu0
        %523 = vdwg.mxu0
        %v524 = vmax.f32 %v462, 0.0
        %v525 = vmax.f32 %v465, 0.0
        %v526 = vmax.f32 %v470, 0.0
        %v527 = vmax.f32 %v473, 0.0
        %v528 = vmax.f32 %v478, 0.0
        %v529 = vmax.f32 %v481, 0.0
        %v530 = vmax.f32 %v486, 0.0
        %v531 = vmax.f32 %v489, 0.0
        %v532 = vmax.f32 %v494, 0.0
        %v533 = vmax.f32 %v497, 0.0
        %v534 = vmax.f32 %v502, 0.0
        %v535 = vmax.f32 %v505, 0.0
        %v536 = vmax.f32 %v510, 0.0
        %v537 = vmax.f32 %v513, 0.0
        %v538 = vmax.f32 %v518, 0.0
        %v539 = vmax.f32 %v521, 0.0
        %v540 = vld [vmem:[#allocation2] sm:$0x1]
        %v541 = vadd.f32 %v524, %v525
        %v542 = vadd.f32 %v541, %v526
        %v543 = vadd.f32 %v542, %v527
        %v544 = vadd.f32 %v543, %v528
        %v545 = vadd.f32 %v544, %v529
        %v546 = vadd.f32 %v545, %v530
        %v547 = vadd.f32 %v546, %v531
        %v548 = vadd.f32 %v547, %v532
        %v549 = vadd.f32 %v548, %v533
        %v550 = vadd.f32 %v549, %v534
        %v551 = vadd.f32 %v550, %v535
        %v552 = vadd.f32 %v551, %v536
        %v553 = vadd.f32 %v552, %v537
        %v554 = vadd.f32 %v553, %v538
        %v555 = vadd.f32 %v554, %v539
        %v556 = vrot.slane %v555, 4
        %v557 = vadd.f32 %v555, %v556
        %v558 = vrot.slane %v557, 2
        %v559 = vadd.f32 %v557, %v558
        %v560 = vrot.slane %v559, 1
        %v561 = vadd.f32 %v559, %v560
        %v562 = vadd.f32 %v540, %v561
        %563 = vst [vmem:[#allocation2] sm:$0x1] %v562
        %p564 = scmp.eq.s32.totalorder %s26, 1
        // Predicated region
        $region45: #{cnn_model_forward.1} parent=39 // pred_check
          %p565 = pneg %p564
        $region46: #{cnn_model_forward.1} parent=39 // pred_check_branch
          %567 = sbr.rel (%p565) target = $region48
        $region47: #{cnn_model_forward.1} parent=39 // pred_region
          %v568 = vld [vmem:[#allocation2] sm:$0x1]
          %v569 = vmul.f32 %v568, 0.00390625
          %570 = vst [vmem:[%s267] sm:$0x1] %v569
          %v571 = vld [vmem:[%s3] sm:$0xff]
          %v572 = vld [vmem:[%s3 + $0x8] sm:$0xff]
          %v573 = vld [vmem:[%s3 + $0x10] sm:$0xff]
          %v574 = vld [vmem:[%s3 + $0x18] sm:$0xff]
          %v575 = vld [vmem:[%s3 + $0x20] sm:$0xff]
          %v576 = vld [vmem:[%s3 + $0x28] sm:$0xff]
          %v577 = vld [vmem:[%s3 + $0x30] sm:$0xff]
          %v578 = vld [vmem:[%s3 + $0x38] sm:$0xff]
          %v579 = vld [vmem:[%s3 + $0x40] sm:$0xff]
          %v580 = vld [vmem:[%s3 + $0x48] sm:$0xff]
          %v581 = vld [vmem:[%s3 + $0x50] sm:$0xff]
          %v582 = vld [vmem:[%s3 + $0x58] sm:$0xff]
          %v583 = vld [vmem:[%s3 + $0x60] sm:$0xff]
          %v584 = vld [vmem:[%s3 + $0x68] sm:$0xff]
          %v585 = vld [vmem:[%s3 + $0x70] sm:$0xff]
          %v586 = vld [vmem:[%s3 + $0x78] sm:$0xff]
          %v587 = vld [vmem:[%s4] sm:$0x1]
          %588 = vmatprep.subr.mxu0 0.0
          %589 = vmatpush1.msra.mxu0 %v571
          %590 = vmatprep.subr.mxu0 0.0
          %591 = vmatpush1.msra.mxu0 %v572
          %592 = vmatprep.subr.mxu0 0.0
          %593 = vmatpush1.msra.mxu0 %v573
          %594 = vmatprep.subr.mxu0 0.0
          %595 = vmatpush1.msra.mxu0 %v574
          %596 = vmatprep.subr.mxu0 0.0
          %597 = vmatpush1.msra.mxu0 %v575
          %598 = vmatprep.subr.mxu0 0.0
          %599 = vmatpush1.msra.mxu0 %v576
          %600 = vmatprep.subr.mxu0 0.0
          %601 = vmatpush1.msra.mxu0 %v577
          %602 = vmatprep.subr.mxu0 0.0
          %603 = vmatpush1.msra.mxu0 %v578
          %604 = vmatprep.subr.mxu0 0.0
          %605 = vmatpush1.msra.mxu0 %v579
          %606 = vmatprep.subr.mxu0 0.0
          %607 = vmatpush1.msra.mxu0 %v580
          %608 = vmatprep.subr.mxu0 0.0
          %609 = vmatpush1.msra.mxu0 %v581
          %610 = vmatprep.subr.mxu0 0.0
          %611 = vmatpush1.msra.mxu0 %v582
          %612 = vmatprep.subr.mxu0 0.0
          %613 = vmatpush1.msra.mxu0 %v583
          %614 = vmatprep.subr.mxu0 0.0
          %615 = vmatpush1.msra.mxu0 %v584
          %616 = vmatprep.subr.mxu0 0.0
          %617 = vmatpush1.msra.mxu0 %v585
          %618 = vmatprep.subr.mxu0 0.0
          %619 = vmatpush1.msra.mxu0 %v586
          %620 = vmatprep.subr.mxu0 0.0
          %621 = vmatpush1.msra.mxu0 0.0
          %622 = vmatprep.subr.mxu0 0.0
          %623 = vmatpush1.msra.mxu0 0.0
          %624 = vmatprep.subr.mxu0 0.0
          %625 = vmatpush1.msra.mxu0 0.0
          %626 = vmatprep.subr.mxu0 0.0
          %627 = vmatpush1.msra.mxu0 0.0
          %628 = vmatprep.subr.mxu0 0.0
          %629 = vmatpush1.msra.mxu0 0.0
          %630 = vmatprep.subr.mxu0 0.0
          %631 = vmatpush1.msra.mxu0 0.0
          %632 = vmatprep.subr.mxu0 0.0
          %633 = vmatpush1.msra.mxu0 0.0
          %634 = vmatprep.subr.mxu0 0.0
          %635 = vmatpush1.msra.mxu0 0.0
          %636 = vmatprep.subr.mxu0 0.0
          %637 = vmatpush1.msra.mxu0 0.0
          %638 = vmatprep.subr.mxu0 0.0
          %639 = vmatpush1.msra.mxu0 0.0
          %640 = vmatprep.subr.mxu0 0.0
          %641 = vmatpush1.msra.mxu0 0.0
          %642 = vmatprep.subr.mxu0 0.0
          %643 = vmatpush1.msra.mxu0 0.0
          %644 = vmatprep.subr.mxu0 0.0
          %645 = vmatpush1.msra.mxu0 0.0
          %646 = vmatprep.subr.mxu0 0.0
          %647 = vmatpush1.msra.mxu0 0.0
          %648 = vmatprep.subr.mxu0 0.0
          %649 = vmatpush1.msra.mxu0 0.0
          %650 = vmatprep.subr.mxu0 0.0
          %651 = vmatpush1.msra.mxu0 0.0
          %652 = vmatprep.mubr.f32.mxu0 0.0
          %653 = vmatmul.mubr.f32.gmra.mrb[0].mxu0 %v569
          %v654 = vpop.f32.mrb[0].mxu0
          %v655 = vadd.f32 %v587, %v654
          %v656 = vpop.f32.mrb[0].mxu0
          %657 = vdwg.mxu0
          %658 = vst [vmem:[%s285] sm:$0x1] %v655
        $region48: #{cnn_model_forward.1} parent=39 // pred_fallthru
          _
        %s659 = sand.u32 %s155, 1
        %s660 = scalar_lea.sflag [#allocation4], %s659
        %s661 = sand.u32 %s155, 1
        %s662 = scalar_lea.vmem [#allocation3], %s661
        %p663 = scmp.lt.s32.totalorder %s25, 1
        %s664 = scalar_select %p663, %s25, 1
        %s665 = scalar_lea.vmem %s6, %s664
        // Predicated region
        $region49: #{cnn_model_forward.1} parent=39 // pred_check
          %p666 = pneg %p165
        $region50: #{cnn_model_forward.1} parent=39 // pred_check_branch
          %668 = sbr.rel (%p666) target = $region52
        $region51: #{cnn_model_forward.1} parent=39 // pred_region
          %s670 = ssub.s32 16, 16
          %671 = vsyncadd %s660, %s670
          %s672 = smul.addr %s25, 16
          %s673 = scalar_lea.hbm %s5, %s672
          %s675 = sshll.u32 %s662, 4
          %s676 = int_to_ptr.vmem [resolvable:$true] %s675
          %678 = dma.vmem_to_hbm [thread:$0]  %s676, 16, %s673, %s660
        $region52: #{cnn_model_forward.1} parent=39 // pred_fallthru
          _
        // Predicated region
        $region53: #{cnn_model_forward.1} parent=39 // pred_check
          %p679 = pneg %p191
        $region54: #{cnn_model_forward.1} parent=39 // pred_check_branch
          %681 = sbr.rel (%p679) target = $region56
        $region55: #{cnn_model_forward.1} parent=39 // pred_region
          _
        $region56: #{cnn_model_forward.1} parent=39 // pred_fallthru
          _
      $region40: #{cnn_model_forward.1} parent=5 // pred_fallthru
        _
      %p682 = scmp.le.s32.totalorder 2, %s16
      // Predicated region
      $region57: #{cnn_model_forward.1} parent=5 // pred_check
        %p683 = pneg %p682
      $region58: #{cnn_model_forward.1} parent=5 // pred_check_branch
        %685 = sbr.rel (%p683) target = $region60
      $region59: #{cnn_model_forward.1} parent=5 // pred_region
        %s686 = ssub.s32 %s16, 2
        // Predicated region
        $region61: #{cnn_model_forward.1} parent=59 // pred_check
          %p687 = pneg %p171
        $region62: #{cnn_model_forward.1} parent=59 // pred_check_branch
          %689 = sbr.rel (%p687) target = $region64
        $region63: #{cnn_model_forward.1} parent=59 // pred_region
          %s690 = sand.u32 %s156, 1
          %s691 = scalar_lea.sflag [#allocation4], %s690
          %s692 = sand.u32 %s156, 1
          %s693 = scalar_lea.vmem [#allocation3], %s692
          %694 = dma.done %s691, 16
        $region64: #{cnn_model_forward.1} parent=59 // pred_fallthru
          _
        // Predicated region
        $region65: #{cnn_model_forward.1} parent=59 // pred_check
          %p695 = pneg %p197
        $region66: #{cnn_model_forward.1} parent=59 // pred_check_branch
          %697 = sbr.rel (%p695) target = $region68
        $region67: #{cnn_model_forward.1} parent=59 // pred_region
          %p698 = scmp.lt.s32.totalorder %s27, 1
          %s699 = scalar_select %p698, %s27, 1
          %s700 = scalar_lea.vmem %s6, %s699
        $region68: #{cnn_model_forward.1} parent=59 // pred_fallthru
          _
      $region60: #{cnn_model_forward.1} parent=5 // pred_fallthru
        _
    $region6: #{cnn_model_forward.1} parent=1 // loop_footer
      %s20 = sadd.s32 1, %s16
    $region7: #{cnn_model_forward.1} parent=1 // loop_footer_branch
      %15 = sbr.rel target = $region3
    $region8: #{cnn_model_forward.1} parent=1 // loop_exit
      _
    %701 = vsyncpa [#allocation4], 1
    %s702 = scalar_lea.sflag [#allocation4], 1
    %703 = vsyncpa %s702, 1

</llo_original>
